<compile_context>
chip_gen: v6e
topology: v6e:2x2x1
jax: 0.10.0
libtpu: 0.0.40
codegen_flags: <defaults>
</compile_context>

<pallas_src>
import jax
import jax.numpy as jnp
from jax.experimental import pallas as pl
from jax.experimental.pallas import tpu as pltpu

EPS = 1e-8  # torch cosine_similarity default eps (clamped per-norm)


def _sbfc_partial_kernel(emb_ref, buf_ref, a_ref, scale_ref, out_ref):
    # emb_ref  : (1, TILE_N, Dp)  noise embeddings, realization r, batch tile i
    # buf_ref  : (1, Bp, Dp)      buffer embeddings, realization r (B padded)
    # a_ref    : (TILE_N, Bp)     exact 0/1 label-match matrix, input dtype
    # scale_ref: (TILE_N, 1)      f32, 1/count if label buffered else 0
    # out_ref  : (1, 1, 128)      lane-dense partial sums for this (i, r)
    emb = emb_ref[0].astype(jnp.float32)                  # (TILE_N, Dp)
    scale = scale_ref[...]                                # (TILE_N, 1) f32

    # Per-sample class center: one MXU matmul in the HBM dtype, f32 accumulate,
    # then the exact f32 1/count scaling (zero rows stay zero).
    centers = jnp.dot(a_ref[...], buf_ref[0],
                      preferred_element_type=jnp.float32) * scale

    # Row-wise reductions (lane axis); distance via the norm identity, no
    # explicit (TILE_N, Dp) diff pass.
    dot_ec = jnp.sum(emb * centers, axis=-1, keepdims=True)
    ee = jnp.sum(emb * emb, axis=-1, keepdims=True)
    cc = jnp.sum(centers * centers, axis=-1, keepdims=True)

    inv_ne = jax.lax.rsqrt(jnp.maximum(ee, EPS * EPS))    # 1/max(||e||, eps)
    inv_nc = jax.lax.rsqrt(jnp.maximum(cc, EPS * EPS))    # 1/max(||c||, eps)
    cos = dot_ec * inv_ne * inv_nc
    n_e = jnp.sqrt(ee)
    dist = jnp.sqrt(jnp.maximum(ee + cc - 2.0 * dot_ec, 0.0))

    msk = jnp.where(scale > 0.0, 1.0, 0.0)                # label present in buffer

    loss_sum = jnp.sum((1.0 - cos) * msk)   # masked sum of (1 - cos)
    dist_sum = jnp.sum(dist * msk)          # masked sum of ||e - c||
    norm_sum = jnp.sum(n_e)                 # all rows (pad rows contribute 0)

    lane = jax.lax.broadcasted_iota(jnp.int32, (1, 1, 128), 2)
    out_ref[...] = (jnp.where(lane == 0, loss_sum, 0.0)
                    + jnp.where(lane == 1, dist_sum, 0.0)
                    + jnp.where(lane == 2, norm_sum, 0.0))


def _round_up(x, m):
    return ((x + m - 1) // m) * m


def _scoped_vmem_limit_bytes():
    """Generation-aware scoped-VMEM limit (half of physical, capped at 64 MiB)."""
    cap = None
    try:
        info = pltpu.get_tpu_info()
        cap = getattr(info, "vmem_capacity_bytes", None)
    except Exception:
        cap = None
    if not cap:
        cap = 64 * 1024 * 1024  # conservative fallback (v7x per-TC physical)
    return int(min(cap // 2, 64 * 1024 * 1024))


def noise_similar_buffer_center_loss(noise_embed, noise_buffer_embed, labels,
                                     buffer_labels, *, n_shots=None,
                                     buffer_size=None, w=1.0):
    """Pallas implementation of NoiseSimilarBufferCenterLoss.forward.

    noise_embed        : (R, N, D) float (f32/bf16 kept as-is in HBM)
    noise_buffer_embed : (R, B, D) float
    labels             : (N,) int
    buffer_labels      : (B,) int
    Returns (loss * w, log) with device-scalar log values (no host sync).
    """
    del n_shots, buffer_size  # centers grouped by buffer_labels (equivalent)

    r_times, n, d = noise_embed.shape
    b = noise_buffer_embed.shape[1]
    in_dtype = noise_buffer_embed.dtype
    itemsize = jnp.dtype(noise_embed.dtype).itemsize

    # Label membership (pure XLA, fuses into surrounding ops).
    eq = (labels.astype(jnp.int32)[:, None]
          == buffer_labels.astype(jnp.int32)[None, :])                # (N, B)
    counts = jnp.sum(eq, axis=1, keepdims=True)                       # (N, 1) int
    counts_f = counts.astype(jnp.float32)
    # 1/count for buffered rows, 0 otherwise (also serves as the mask: >0).
    scale = jnp.where(counts > 0, 1.0 / jnp.maximum(counts_f, 1.0), 0.0)
    cnt = jnp.sum((counts > 0).astype(jnp.float32))                   # scalar
    # Exact 0/1 matrix in the HBM dtype (bf16 0/1 is exact; f32 scale is applied
    # post-matmul inside the kernel).
    a01 = eq.astype(in_dtype)

    # Lane-dense feature padding and full-width contraction (K) padding; zero
    # rows/cols contribute nothing to any sum.
    d_pad = _round_up(d, 128)
    b_pad = _round_up(b, 128)

    # Tile budget: double-buffered pipelined inputs + f32 body temporaries must
    # fit the (generation-aware) scoped-VMEM limit with headroom.
    vmem_limit = _scoped_vmem_limit_bytes()
    reserve = 2 * 1024 * 1024                       # compiler internal scratch
    fixed = 2 * b_pad * d_pad * itemsize + 2 * 128 * 4      # buf dbl-buf + out
    per_row = (2 * d_pad * itemsize                 # emb tile, double-buffered
               + 2 * b_pad * itemsize               # a01 tile, double-buffered
               + 2 * 128 * 4                        # scale column (lane-padded)
               + 4 * d_pad * 4)                     # f32 body temporaries
    multiple = 8 if itemsize >= 4 else (16 if itemsize == 2 else 32)
    avail = max(vmem_limit - reserve - fixed, per_row * multiple)
    t_max = max(multiple, (avail // per_row) // multiple * multiple)
    tile_n = int(max(multiple, min(_round_up(n, multiple), t_max, 2048)))
    n_pad = _round_up(n, tile_n)
    n_tiles = n_pad // tile_n

    emb_p = jnp.pad(noise_embed, ((0, 0), (0, n_pad - n), (0, d_pad - d)))
    buf_p = jnp.pad(noise_buffer_embed, ((0, 0), (0, b_pad - b), (0, d_pad - d)))
    a_p = jnp.pad(a01, ((0, n_pad - n), (0, b_pad - b)))
    scale_p = jnp.pad(scale, ((0, n_pad - n), (0, 0)))

    cost = pl.CostEstimate(
        flops=int(r_times * n_tiles * (2 * tile_n * b_pad * d_pad
                                       + 8 * tile_n * d_pad)),
        transcendentals=int(4 * r_times * n_pad),
        bytes_accessed=int(r_times * n_pad * d_pad * itemsize
                           + r_times * n_tiles * b_pad * d_pad * itemsize
                           + n_pad * b_pad * itemsize + n_pad * 4
                           + n_tiles * r_times * 128 * 4))

    # Grid order (i outer, r inner): the r-invariant A/scale blocks are fetched
    # once per batch tile; only the small (Bp, Dp) buffer block is re-fetched
    # per realization. Per-(i, r) output blocks keep both axes independent, so
    # both are "parallel" (megacore can shard either).
    partials = pl.pallas_call(
        _sbfc_partial_kernel,
        out_shape=jax.ShapeDtypeStruct((n_tiles * r_times, 1, 128), jnp.float32),
        grid_spec=pltpu.PrefetchScalarGridSpec(
            num_scalar_prefetch=0,
            grid=(n_tiles, r_times),
            in_specs=[
                pl.BlockSpec((1, tile_n, d_pad), lambda i, r: (r, i, 0)),
                pl.BlockSpec((1, b_pad, d_pad), lambda i, r: (r, 0, 0)),
                pl.BlockSpec((tile_n, b_pad), lambda i, r: (i, 0)),
                pl.BlockSpec((tile_n, 1), lambda i, r: (i, 0)),
            ],
            out_specs=pl.BlockSpec((1, 1, 128),
                                   lambda i, r: (i * r_times + r, 0, 0)),
        ),
        compiler_params=pltpu.CompilerParams(
            dimension_semantics=("parallel", "parallel"),
            vmem_limit_bytes=vmem_limit),
        cost_estimate=cost,
    )(emb_p, buf_p, a_p, scale_p)

    loss_sum = jnp.sum(partials[:, 0, 0])
    dist_sum = jnp.sum(partials[:, 0, 1])
    norm_sum = jnp.sum(partials[:, 0, 2])

    r_f = jnp.float32(r_times)
    # NaN when no label is present in the buffer, matching torch .mean() on an
    # empty selection.
    sbfc = loss_sum / (r_f * cnt)
    dis_pt = dist_sum / (r_f * cnt)
    norm_mean = norm_sum / (r_f * jnp.float32(n))

    log = {"Noise_SBFCLoss": sbfc, "Noise_norm": norm_mean,
           "Noise_dis_pt": dis_pt}
    return sbfc * w, log


def _reference(noise_embed, noise_buffer_embed, labels, buffer_labels, w):
    """Pure-JAX mirror of the assumed PyTorch semantics (loop over r)."""
    eps = 1e-8
    r_times = noise_embed.shape[0]
    eq = (labels[:, None] == buffer_labels[None, :]).astype(jnp.float32)
    counts = jnp.sum(eq, axis=1, keepdims=True)
    msk = (counts[:, 0] > 0).astype(jnp.float32)
    avg = eq / jnp.maximum(counts, 1.0)
    l_tot = 0.0
    log = {"SBFCLoss": 0.0, "norm": 0.0, "dis_pt": 0.0}
    for r in range(r_times):
        emb = noise_embed[r].astype(jnp.float32)
        buf = noise_buffer_embed[r].astype(jnp.float32)
        centers = avg @ buf
        n_e = jnp.linalg.norm(emb, axis=1)
        n_c = jnp.linalg.norm(centers, axis=1)
        cos = jnp.sum(emb * centers, axis=1) / (
            jnp.maximum(n_e, eps) * jnp.maximum(n_c, eps))
        dist = jnp.linalg.norm(emb - centers, axis=1)
        loss_r = jnp.sum((1.0 - cos) * msk) / jnp.sum(msk)
        l_tot = l_tot + loss_r
        log["SBFCLoss"] = log["SBFCLoss"] + loss_r
        log["norm"] = log["norm"] + jnp.mean(n_e)
        log["dis_pt"] = log["dis_pt"] + jnp.sum(dist * msk) / jnp.sum(msk)
    l_tot = l_tot / r_times
    log = {"Noise_" + k: v / r_times for k, v in log.items()}
    return l_tot * w, log


if __name__ == "__main__":
    key = jax.random.PRNGKey(0)
    R, N, D = 3, 8, 32            # random_times=3, batch=8, embed dim=32
    N_BUF_CLASSES, N_SHOTS = 4, 2
    B = N_BUF_CLASSES * N_SHOTS   # buffer_size = 8 buffered samples
    W = 0.5

    k1, k2, k3 = jax.random.split(key, 3)
    noise_embed = jax.random.normal(k1, (R, N, D), dtype=jnp.float32)
    noise_buffer_embed = jax.random.normal(k2, (R, B, D), dtype=jnp.float32)
    labels = jax.random.randint(k3, (N,), 0, 6, dtype=jnp.int32)
    labels = labels.at[0].set(0)  # guarantee >=1 sample whose class is buffered
    buffer_labels = jnp.repeat(jnp.arange(N_BUF_CLASSES, dtype=jnp.int32),
                               N_SHOTS)

    loss, log = noise_similar_buffer_center_loss(
        noise_embed, noise_buffer_embed, labels, buffer_labels,
        n_shots=N_SHOTS, buffer_size=B, w=W)
    jax.block_until_ready(loss)

    ref_loss, ref_log = _reference(noise_embed, noise_buffer_embed, labels,
                                   buffer_labels, W)
    assert jnp.allclose(loss, ref_loss, atol=1e-5, rtol=1e-5), (loss, ref_loss)
    for k in ref_log:
        assert jnp.allclose(log[k], ref_log[k], atol=1e-5, rtol=1e-5), (
            k, log[k], ref_log[k])

    print("KERNEL_OK")
</pallas_src>

<mosaic_0001>
module attributes {stable_mosaic.version = 11 : i64} {
  func.func @_sbfc_partial_kernel(%arg0: i32, %arg1: i32, %arg2: memref<1x8x128xf32, #tpu.memory_space<vmem>>, %arg3: memref<1x128x128xf32, #tpu.memory_space<vmem>>, %arg4: memref<8x128xf32, #tpu.memory_space<vmem>>, %arg5: memref<8x1xf32, #tpu.memory_space<vmem>>, %arg6: memref<1x1x128xf32, #tpu.memory_space<vmem>>) attributes {dimension_semantics = [#tpu.dimension_semantics<parallel>, #tpu.dimension_semantics<parallel>], iteration_bounds = array<i64: 1, 3>, scalar_prefetch = 0 : i64, scratch_operands = 0 : i64, tpu.core_type = #tpu.core_type<tc>, window_params = [{transform_indices = @transform_0, window_bounds = array<i64: 1, 8, 128>}, {transform_indices = @transform_1, window_bounds = array<i64: 1, 128, 128>}, {transform_indices = @transform_2, window_bounds = array<i64: 8, 128>}, {transform_indices = @transform_3, window_bounds = array<i64: 8, 1>}, {transform_indices = @transform_4, window_bounds = array<i64: 1, 1, 128>}]} {
    %c0 = arith.constant 0 : index
    %c0_0 = arith.constant 0 : index
    %c0_1 = arith.constant 0 : index
    %0 = vector.load %arg2[%c0, %c0_0, %c0_1] : memref<1x8x128xf32, #tpu.memory_space<vmem>>, vector<1x8x128xf32>
    %1 = vector.shape_cast %0 : vector<1x8x128xf32> to vector<8x128xf32>
    %c0_2 = arith.constant 0 : index
    %c0_3 = arith.constant 0 : index
    %2 = vector.load %arg5[%c0_2, %c0_3] : memref<8x1xf32, #tpu.memory_space<vmem>>, vector<8x1xf32>
    %c0_4 = arith.constant 0 : index
    %c0_5 = arith.constant 0 : index
    %3 = vector.load %arg4[%c0_4, %c0_5] : memref<8x128xf32, #tpu.memory_space<vmem>>, vector<8x128xf32>
    %c0_6 = arith.constant 0 : index
    %c0_7 = arith.constant 0 : index
    %c0_8 = arith.constant 0 : index
    %4 = vector.load %arg3[%c0_6, %c0_7, %c0_8] : memref<1x128x128xf32, #tpu.memory_space<vmem>>, vector<1x128x128xf32>
    %5 = vector.shape_cast %4 : vector<1x128x128xf32> to vector<128x128xf32>
    %cst = arith.constant dense<0.000000e+00> : vector<8x128xf32>
    %6 = tpu.matmul %3, %5, %cst {dimension_numbers = #tpu.dot_dimension_numbers<[1], [0], [0], [1], [0, 0, 1, 1], [], []>} : vector<8x128xf32>, vector<128x128xf32>, vector<8x128xf32> -> vector<8x128xf32>
    %7 = vector.broadcast %2 : vector<8x1xf32> to vector<8x128xf32>
    %8 = arith.mulf %6, %7 : vector<8x128xf32>
    %9 = arith.mulf %1, %8 : vector<8x128xf32>
    %cst_9 = arith.constant dense<0.000000e+00> : vector<8xf32>
    %10 = vector.multi_reduction <add>, %9, %cst_9 [1] : vector<8x128xf32> to vector<8xf32>
    %11 = vector.shape_cast %10 : vector<8xf32> to vector<8x1xf32>
    %12 = arith.mulf %1, %1 : vector<8x128xf32>
    %cst_10 = arith.constant dense<0.000000e+00> : vector<8xf32>
    %13 = vector.multi_reduction <add>, %12, %cst_10 [1] : vector<8x128xf32> to vector<8xf32>
    %14 = vector.shape_cast %13 : vector<8xf32> to vector<8x1xf32>
    %15 = arith.mulf %8, %8 : vector<8x128xf32>
    %cst_11 = arith.constant dense<0.000000e+00> : vector<8xf32>
    %16 = vector.multi_reduction <add>, %15, %cst_11 [1] : vector<8x128xf32> to vector<8xf32>
    %17 = vector.shape_cast %16 : vector<8xf32> to vector<8x1xf32>
    %cst_12 = arith.constant 1.000000e-16 : f32
    %18 = vector.broadcast %cst_12 : f32 to vector<8x1xf32>
    %19 = arith.maximumf %14, %18 : vector<8x1xf32>
    %20 = math.rsqrt %19 : vector<8x1xf32>
    %cst_13 = arith.constant 1.000000e-16 : f32
    %21 = vector.broadcast %cst_13 : f32 to vector<8x1xf32>
    %22 = arith.maximumf %17, %21 : vector<8x1xf32>
    %23 = math.rsqrt %22 : vector<8x1xf32>
    %24 = arith.mulf %11, %20 : vector<8x1xf32>
    %25 = arith.mulf %24, %23 : vector<8x1xf32>
    %26 = math.sqrt %14 : vector<8x1xf32>
    %27 = arith.addf %14, %17 : vector<8x1xf32>
    %cst_14 = arith.constant 2.000000e+00 : f32
    %28 = vector.broadcast %cst_14 : f32 to vector<8x1xf32>
    %29 = arith.mulf %28, %11 : vector<8x1xf32>
    %30 = arith.subf %27, %29 : vector<8x1xf32>
    %cst_15 = arith.constant 0.000000e+00 : f32
    %31 = vector.broadcast %cst_15 : f32 to vector<8x1xf32>
    %32 = arith.maximumf %30, %31 : vector<8x1xf32>
    %33 = math.sqrt %32 : vector<8x1xf32>
    %cst_16 = arith.constant 0.000000e+00 : f32
    %34 = vector.broadcast %cst_16 : f32 to vector<8x1xf32>
    %35 = arith.cmpf ogt, %2, %34 : vector<8x1xf32>
    %cst_17 = arith.constant 1.000000e+00 : f32
    %cst_18 = arith.constant 0.000000e+00 : f32
    %36 = vector.broadcast %cst_17 : f32 to vector<8x1xf32>
    %37 = vector.broadcast %cst_18 : f32 to vector<8x1xf32>
    %38 = arith.select %35, %36, %37 : vector<8x1xi1>, vector<8x1xf32>
    %cst_19 = arith.constant 1.000000e+00 : f32
    %39 = vector.broadcast %cst_19 : f32 to vector<8x1xf32>
    %40 = arith.subf %39, %25 : vector<8x1xf32>
    %41 = arith.mulf %40, %38 : vector<8x1xf32>
    %42 = vector.shape_cast %41 : vector<8x1xf32> to vector<1x8x1xf32>
    %cst_20 = arith.constant dense<0.000000e+00> : vector<1xf32>
    %43 = vector.multi_reduction <add>, %42, %cst_20 [1, 2] : vector<1x8x1xf32> to vector<1xf32>
    %44 = vector.shape_cast %43 : vector<1xf32> to vector<1x1x1xf32>
    %45 = vector.extract %44[0, 0, 0] : f32 from vector<1x1x1xf32>
    %46 = arith.mulf %33, %38 : vector<8x1xf32>
    %47 = vector.shape_cast %46 : vector<8x1xf32> to vector<1x8x1xf32>
    %cst_21 = arith.constant dense<0.000000e+00> : vector<1xf32>
    %48 = vector.multi_reduction <add>, %47, %cst_21 [1, 2] : vector<1x8x1xf32> to vector<1xf32>
    %49 = vector.shape_cast %48 : vector<1xf32> to vector<1x1x1xf32>
    %50 = vector.extract %49[0, 0, 0] : f32 from vector<1x1x1xf32>
    %51 = vector.shape_cast %26 : vector<8x1xf32> to vector<1x8x1xf32>
    %cst_22 = arith.constant dense<0.000000e+00> : vector<1xf32>
    %52 = vector.multi_reduction <add>, %51, %cst_22 [1, 2] : vector<1x8x1xf32> to vector<1xf32>
    %53 = vector.shape_cast %52 : vector<1xf32> to vector<1x1x1xf32>
    %54 = vector.extract %53[0, 0, 0] : f32 from vector<1x1x1xf32>
    %55 = tpu.iota {dimensions = array<i32: 2>} : vector<1x1x128xi32>
    %c0_i32 = arith.constant 0 : i32
    %56 = vector.broadcast %c0_i32 : i32 to vector<1x1x128xi32>
    %57 = arith.cmpi eq, %55, %56 : vector<1x1x128xi32>
    %cst_23 = arith.constant 0.000000e+00 : f32
    %58 = vector.broadcast %45 : f32 to vector<1x1x128xf32>
    %59 = vector.broadcast %cst_23 : f32 to vector<1x1x128xf32>
    %60 = arith.select %57, %58, %59 : vector<1x1x128xi1>, vector<1x1x128xf32>
    %c1_i32 = arith.constant 1 : i32
    %61 = vector.broadcast %c1_i32 : i32 to vector<1x1x128xi32>
    %62 = arith.cmpi eq, %55, %61 : vector<1x1x128xi32>
    %cst_24 = arith.constant 0.000000e+00 : f32
    %63 = vector.broadcast %50 : f32 to vector<1x1x128xf32>
    %64 = vector.broadcast %cst_24 : f32 to vector<1x1x128xf32>
    %65 = arith.select %62, %63, %64 : vector<1x1x128xi1>, vector<1x1x128xf32>
    %66 = arith.addf %60, %65 : vector<1x1x128xf32>
    %c2_i32 = arith.constant 2 : i32
    %67 = vector.broadcast %c2_i32 : i32 to vector<1x1x128xi32>
    %68 = arith.cmpi eq, %55, %67 : vector<1x1x128xi32>
    %cst_25 = arith.constant 0.000000e+00 : f32
    %69 = vector.broadcast %54 : f32 to vector<1x1x128xf32>
    %70 = vector.broadcast %cst_25 : f32 to vector<1x1x128xf32>
    %71 = arith.select %68, %69, %70 : vector<1x1x128xi1>, vector<1x1x128xf32>
    %72 = arith.addf %66, %71 : vector<1x1x128xf32>
    %c0_26 = arith.constant 0 : index
    %c0_27 = arith.constant 0 : index
    %c0_28 = arith.constant 0 : index
    %73 = vector.load %arg6[%c0_26, %c0_27, %c0_28] : memref<1x1x128xf32, #tpu.memory_space<vmem>>, vector<1x1x128xf32>
    tpu.vector_store %arg6[%c0_26, %c0_27, %c0_28], %72 {strides = array<i32>} : memref<1x1x128xf32, #tpu.memory_space<vmem>>, vector<1x1x128xf32>,
    return
  }
  func.func @transform_0(%arg0: i32, %arg1: i32) -> (i32, i32, i32) {
    %c0_i32 = arith.constant 0 : i32
    %c0_i32_0 = arith.constant 0 : i32
    return %arg1, %arg0, %c0_i32 : i32, i32, i32
  }
  func.func @transform_1(%arg0: i32, %arg1: i32) -> (i32, i32, i32) {
    %c0_i32 = arith.constant 0 : i32
    %c0_i32_0 = arith.constant 0 : i32
    %c0_i32_1 = arith.constant 0 : i32
    return %arg1, %c0_i32, %c0_i32_0 : i32, i32, i32
  }
  func.func @transform_2(%arg0: i32, %arg1: i32) -> (i32, i32) {
    %c0_i32 = arith.constant 0 : i32
    %c0_i32_0 = arith.constant 0 : i32
    return %arg0, %c0_i32 : i32, i32
  }
  func.func @transform_3(%arg0: i32, %arg1: i32) -> (i32, i32) {
    %c0_i32 = arith.constant 0 : i32
    %c0_i32_0 = arith.constant 0 : i32
    return %arg0, %c0_i32 : i32, i32
  }
  func.func @transform_4(%arg0: i32, %arg1: i32) -> (i32, i32, i32) {
    %c3_i32 = arith.constant 3 : i32
    %0 = arith.muli %arg0, %c3_i32 : i32
    %1 = arith.addi %0, %arg1 : i32
    %c0_i32 = arith.constant 0 : i32
    %c0_i32_0 = arith.constant 0 : i32
    %c0_i32_1 = arith.constant 0 : i32
    return %1, %c0_i32, %c0_i32_0 : i32, i32, i32
  }
}

</mosaic_0001>

<llo_original>
// kernel: tpu_custom_call.1
$region0: #{tpu_custom_call.1}
  #allocation0 [shape = 'u32[]', space=smem, size = 0x4, offset = 0x4, fixed_abs, tag = 'smem constant byte address 0x4 - core index']
  #allocation1 [shape = 'u32[144,128]{1,0:T(1,128)}', space=vmem, size = 0x12000, scoped, tag = 'internal scratch']
  %s0 = inlined_call_operand.hbm [shape: f32[3,8,128], index: 0, kind: input, shape index: {}]
  %s1 = inlined_call_operand.hbm [shape: f32[3,128,128], index: 1, kind: input, shape index: {}]
  %s2 = inlined_call_operand.vmem [shape: f32[8,128], index: 2, kind: input, shape index: {}]
  %s3 = inlined_call_operand.vmem [shape: f32[8,1], index: 3, kind: input, shape index: {}]
  %s4 = inlined_call_operand.hbm [shape: f32[3,1,128], index: 4, kind: output, shape index: {}]
  %s5 = sld [smem:[#allocation0]]
  $region57: #{tpu_custom_call.1} parent=0
    _
  %s7 = ssub.s32 1, %s5
  %s8 = scalar_select 0, %s7, %s5
  $region1: #{tpu_custom_call.1} parent=0
    #allocation2 [shape = 'u8[8192]{0}', space=vmem, size = 0x2000, scoped, tag = 'input window, operand 0']
    #allocation3 [shape = 's32[2]{0}', space=sflag, size = 0x8, scoped, tag = 'scoped memory for tpu_custom_call.1']
    #allocation4 [shape = 's32[2]{0}', space=sflag, size = 0x8, scoped, tag = 'scoped memory for tpu_custom_call.1']
    #allocation5 [shape = 'u8[131072]{0}', space=vmem, size = 0x20000, scoped, tag = 'input window, operand 1']
    #allocation6 [shape = 's32[2]{0}', space=sflag, size = 0x8, scoped, tag = 'scoped memory for tpu_custom_call.1']
    #allocation7 [shape = 'u8[1024]{0}', space=vmem, size = 0x400, scoped, tag = 'output window, operand 0']
    %9 = vsyncpa [#allocation3], 0
    %s10 = scalar_lea.sflag [#allocation3], 1
    %11 = vsyncpa %s10, 0
    %12 = vsyncpa [#allocation6], 0
    %s13 = scalar_lea.sflag [#allocation6], 1
    %14 = vsyncpa %s13, 0
    %15 = vsyncpa [#allocation4], 0
    %s16 = scalar_lea.sflag [#allocation4], 1
    %17 = vsyncpa %s16, 0
    loop: start=0, step=1, limit=5
    $region2: #{tpu_custom_call.1} parent=1 // loop_pre_header
      _
    $region3: #{tpu_custom_call.1} parent=1 // loop_header
      %s19 = sphi 0, %s23
      %p20 = scmp.ge.s32.totalorder %s19, 5
      %s26 = sphi 0, %s38
      %s27 = sphi 0, %s34
      %s28 = sphi 0, %s26
      %s29 = sphi 0, %s27
      %s30 = sphi 0, %s28
      %s31 = sphi 0, %s29
      %s43 = sphi 0, %s45
      %s46 = sphi 0, %s43
      %s47 = sphi 0, %s46
      %s63 = sphi 0, %s47
      %s69 = sphi 0, %s71
      %s72 = sphi 0, %s69
      %s73 = sphi 0, %s72
      %s89 = sphi 0, %s73
      %s95 = sphi 0, %s97
      %s98 = sphi 0, %s95
      %s99 = sphi 0, %s98
      %s115 = sphi 0, %s99
      %s121 = sphi 0, %s123
      %s124 = sphi 0, %s121
      %s125 = sphi 0, %s124
      %s141 = sphi 0, %s125
      %s151 = sphi 0, %s153
      %s154 = sphi 0, %s151
      %s155 = sphi 0, %s154
      %s171 = sphi 0, %s155
    $region4: #{tpu_custom_call.1} parent=1 // loop_header_branch
      %22 = sbr.rel (%p20) target = $region8
    $region5: #{tpu_custom_call.1} parent=1 // loop_body
      %s24 = ssub.s32 %s19, 1
      %s25 = ssub.s32 %s19, 2
      %s32 = sadd.s32 1, %s27
      %p33 = scmp.ge.s32.totalorder %s32, 3
      %s34 = scalar_select %p33, 0, %s32
      %s35 = sadd.s32 1, %s26
      %s36 = scalar_select %p33, %s35, %s26
      %p37 = scmp.ge.s32.totalorder %s36, 1
      %s38 = scalar_select %p37, 0, %s36
      %s39 = ssub.s32 %s27, %s34
      %s40 = ssub.s32 %s26, %s38
      %s41 = sor.u32 %s39, %s40
      %p42 = scmp.eq.s32.totalorder %s41, 0
      %s44 = sadd.s32 %s43, 1
      %s45 = scalar_select %p42, %s43, %s44
      %p48 = pneg %p42
      %p49 = scmp.eq.s32.totalorder %s19, 2
      %p50 = por %p48, %p49
      %p51 = scmp.ne.s32.totalorder %s43, %s46
      %p52 = scmp.eq.s32.totalorder %s19, 0
      %p53 = por %p51, %p52
      %p54 = scmp.ne.s32.totalorder %s43, %s46
      %p55 = scmp.eq.s32.totalorder %s24, 2
      %p56 = por %p54, %p55
      %p57 = scmp.ne.s32.totalorder %s46, %s47
      %p58 = scmp.eq.s32.totalorder %s24, 0
      %p59 = por %p57, %p58
      %p60 = scmp.ne.s32.totalorder %s46, %s47
      %p61 = scmp.eq.s32.totalorder %s25, 2
      %p62 = por %p60, %p61
      %p64 = scmp.ne.s32.totalorder %s47, %s63
      %p65 = scmp.eq.s32.totalorder %s25, 0
      %p66 = por %p64, %p65
      %s67 = ssub.s32 %s27, %s34
      %p68 = scmp.eq.s32.totalorder %s67, 0
      %s70 = sadd.s32 %s69, 1
      %s71 = scalar_select %p68, %s69, %s70
      %p74 = pneg %p68
      %p75 = scmp.eq.s32.totalorder %s19, 2
      %p76 = por %p74, %p75
      %p77 = scmp.ne.s32.totalorder %s69, %s72
      %p78 = scmp.eq.s32.totalorder %s19, 0
      %p79 = por %p77, %p78
      %p80 = scmp.ne.s32.totalorder %s69, %s72
      %p81 = scmp.eq.s32.totalorder %s24, 2
      %p82 = por %p80, %p81
      %p83 = scmp.ne.s32.totalorder %s72, %s73
      %p84 = scmp.eq.s32.totalorder %s24, 0
      %p85 = por %p83, %p84
      %p86 = scmp.ne.s32.totalorder %s72, %s73
      %p87 = scmp.eq.s32.totalorder %s25, 2
      %p88 = por %p86, %p87
      %p90 = scmp.ne.s32.totalorder %s73, %s89
      %p91 = scmp.eq.s32.totalorder %s25, 0
      %p92 = por %p90, %p91
      %s93 = ssub.s32 %s26, %s38
      %p94 = scmp.eq.s32.totalorder %s93, 0
      %s96 = sadd.s32 %s95, 1
      %s97 = scalar_select %p94, %s95, %s96
      %p100 = pneg %p94
      %p101 = scmp.eq.s32.totalorder %s19, 2
      %p102 = por %p100, %p101
      %p103 = scmp.ne.s32.totalorder %s95, %s98
      %p104 = scmp.eq.s32.totalorder %s19, 0
      %p105 = por %p103, %p104
      %p106 = scmp.ne.s32.totalorder %s95, %s98
      %p107 = scmp.eq.s32.totalorder %s24, 2
      %p108 = por %p106, %p107
      %p109 = scmp.ne.s32.totalorder %s98, %s99
      %p110 = scmp.eq.s32.totalorder %s24, 0
      %p111 = por %p109, %p110
      %p112 = scmp.ne.s32.totalorder %s98, %s99
      %p113 = scmp.eq.s32.totalorder %s25, 2
      %p114 = por %p112, %p113
      %p116 = scmp.ne.s32.totalorder %s99, %s115
      %p117 = scmp.eq.s32.totalorder %s25, 0
      %p118 = por %p116, %p117
      %s119 = ssub.s32 %s26, %s38
      %p120 = scmp.eq.s32.totalorder %s119, 0
      %s122 = sadd.s32 %s121, 1
      %s123 = scalar_select %p120, %s121, %s122
      %p126 = pneg %p120
      %p127 = scmp.eq.s32.totalorder %s19, 2
      %p128 = por %p126, %p127
      %p129 = scmp.ne.s32.totalorder %s121, %s124
      %p130 = scmp.eq.s32.totalorder %s19, 0
      %p131 = por %p129, %p130
      %p132 = scmp.ne.s32.totalorder %s121, %s124
      %p133 = scmp.eq.s32.totalorder %s24, 2
      %p134 = por %p132, %p133
      %p135 = scmp.ne.s32.totalorder %s124, %s125
      %p136 = scmp.eq.s32.totalorder %s24, 0
      %p137 = por %p135, %p136
      %p138 = scmp.ne.s32.totalorder %s124, %s125
      %p139 = scmp.eq.s32.totalorder %s25, 2
      %p140 = por %p138, %p139
      %p142 = scmp.ne.s32.totalorder %s125, %s141
      %p143 = scmp.eq.s32.totalorder %s25, 0
      %p144 = por %p142, %p143
      %s145 = smul.u32 %s26, 3
      %s146 = sadd.s32 %s145, %s27
      %s147 = smul.u32 %s38, 3
      %s148 = sadd.s32 %s147, %s34
      %s149 = ssub.s32 %s146, %s148
      %p150 = scmp.eq.s32.totalorder %s149, 0
      %s152 = sadd.s32 %s151, 1
      %s153 = scalar_select %p150, %s151, %s152
      %p156 = pneg %p150
      %p157 = scmp.eq.s32.totalorder %s19, 2
      %p158 = por %p156, %p157
      %p159 = scmp.ne.s32.totalorder %s151, %s154
      %p160 = scmp.eq.s32.totalorder %s19, 0
      %p161 = por %p159, %p160
      %p162 = scmp.ne.s32.totalorder %s151, %s154
      %p163 = scmp.eq.s32.totalorder %s24, 2
      %p164 = por %p162, %p163
      %p165 = scmp.ne.s32.totalorder %s154, %s155
      %p166 = scmp.eq.s32.totalorder %s24, 0
      %p167 = por %p165, %p166
      %p168 = scmp.ne.s32.totalorder %s154, %s155
      %p169 = scmp.eq.s32.totalorder %s25, 2
      %p170 = por %p168, %p169
      %p172 = scmp.ne.s32.totalorder %s155, %s171
      %p173 = scmp.eq.s32.totalorder %s25, 0
      %p174 = por %p172, %p173
      %p175 = scmp.le.s32.totalorder 1, %s19
      %p176 = scmp.lt.s32.totalorder %s19, 4
      %p177 = pnand %p175, %p176
      %p178 = pneg %p177
      // Predicated region
      $region9: #{tpu_custom_call.1} parent=5 // pred_check
        _
      $region10: #{tpu_custom_call.1} parent=5 // pred_check_branch
        %180 = sbr.rel (%p177) target = $region12
      $region11: #{tpu_custom_call.1} parent=5 // pred_region
        %s181 = ssub.s32 %s19, 1
        // Predicated region
        $region13: #{tpu_custom_call.1} parent=11 // pred_check
          %p182 = pneg %p111
        $region14: #{tpu_custom_call.1} parent=11 // pred_check_branch
          %184 = sbr.rel (%p182) target = $region16
        $region15: #{tpu_custom_call.1} parent=11 // pred_region
          %p185 = scmp.lt.s32.totalorder %s28, 0
          %s186 = scalar_select %p185, %s28, 0
          %s187 = smul.addr %s186, 8
          %s188 = scalar_lea.vmem %s2, %s187
        $region16: #{tpu_custom_call.1} parent=11 // pred_fallthru
          _
        // Predicated region
        $region17: #{tpu_custom_call.1} parent=11 // pred_check
          %p189 = pneg %p137
        $region18: #{tpu_custom_call.1} parent=11 // pred_check_branch
          %191 = sbr.rel (%p189) target = $region20
        $region19: #{tpu_custom_call.1} parent=11 // pred_region
          %p192 = scmp.lt.s32.totalorder %s28, 0
          %s193 = scalar_select %p192, %s28, 0
          %s194 = smul.addr %s193, 8
          %s195 = scalar_lea.vmem %s3, %s194
        $region20: #{tpu_custom_call.1} parent=11 // pred_fallthru
          _
      $region12: #{tpu_custom_call.1} parent=5 // pred_fallthru
        _
      %p196 = scmp.lt.s32.totalorder %s19, 3
      // Predicated region
      $region21: #{tpu_custom_call.1} parent=5 // pred_check
        %p197 = pneg %p196
      $region22: #{tpu_custom_call.1} parent=5 // pred_check_branch
        %199 = sbr.rel (%p197) target = $region24
      $region23: #{tpu_custom_call.1} parent=5 // pred_region
        // Predicated region
        $region25: #{tpu_custom_call.1} parent=23 // pred_check
          %p200 = pneg %p53
        $region26: #{tpu_custom_call.1} parent=23 // pred_check_branch
          %202 = sbr.rel (%p200) target = $region28
        $region27: #{tpu_custom_call.1} parent=23 // pred_region
          %s203 = sand.u32 %s43, 1
          %s204 = scalar_lea.sflag [#allocation3], %s203
          %s205 = sand.u32 %s43, 1
          %s206 = smul.addr %s205, 8
          %s207 = scalar_lea.vmem [#allocation2], %s206
          %s209 = ssub.s32 128, 128
          %210 = vsyncadd %s204, %s209
          %s211 = sadd.s32 %s26, %s27
          %s212 = smul.addr %s211, 128
          %s213 = scalar_lea.hbm %s0, %s212
          %s215 = sshll.u32 %s207, 4
          %s216 = int_to_ptr.vmem [resolvable:$true] %s215
          %218 = dma.hbm_to_vmem [thread:$0]  %s213, 128, %s216, %s204
        $region28: #{tpu_custom_call.1} parent=23 // pred_fallthru
          _
        // Predicated region
        $region29: #{tpu_custom_call.1} parent=23 // pred_check
          %p219 = pneg %p79
        $region30: #{tpu_custom_call.1} parent=23 // pred_check_branch
          %221 = sbr.rel (%p219) target = $region32
        $region31: #{tpu_custom_call.1} parent=23 // pred_region
          %s222 = sand.u32 %s69, 1
          %s223 = scalar_lea.sflag [#allocation6], %s222
          %s224 = sand.u32 %s69, 1
          %s225 = smul.addr %s224, 128
          %s226 = scalar_lea.vmem [#allocation5], %s225
          %s228 = ssub.s32 2048, 2048
          %229 = vsyncadd %s223, %s228
          %s230 = smul.addr %s27, 16
          %s231 = smul.addr %s230, 128
          %s232 = scalar_lea.hbm %s1, %s231
          %s233 = sshll.u32 %s226, 4
          %s234 = int_to_ptr.vmem [resolvable:$true] %s233
          %239 = dma.hbm_to_vmem [thread:$0]  %s232, 2048, %s234, %s223, 128, 128, 8
        $region32: #{tpu_custom_call.1} parent=23 // pred_fallthru
          _
      $region24: #{tpu_custom_call.1} parent=5 // pred_fallthru
        _
      %p240 = scmp.le.s32.totalorder 1, %s19
      %p241 = scmp.lt.s32.totalorder %s19, 4
      %p242 = pnand %p240, %p241
      %p243 = pneg %p242
      // Predicated region
      $region33: #{tpu_custom_call.1} parent=5 // pred_check
        _
      $region34: #{tpu_custom_call.1} parent=5 // pred_check_branch
        %245 = sbr.rel (%p242) target = $region36
      $region35: #{tpu_custom_call.1} parent=5 // pred_region
        %s246 = ssub.s32 %s19, 1
        %s247 = sand.u32 %s46, 1
        %s248 = scalar_lea.sflag [#allocation3], %s247
        %s249 = sand.u32 %s46, 1
        %s250 = smul.addr %s249, 8
        %s251 = scalar_lea.vmem [#allocation2], %s250
        // Predicated region
        $region37: #{tpu_custom_call.1} parent=35 // pred_check
          %p252 = pneg %p59
        $region38: #{tpu_custom_call.1} parent=35 // pred_check_branch
          %254 = sbr.rel (%p252) target = $region40
        $region39: #{tpu_custom_call.1} parent=35 // pred_region
          %255 = dma.done %s248, 128
        $region40: #{tpu_custom_call.1} parent=35 // pred_fallthru
          _
        %s256 = sand.u32 %s72, 1
        %s257 = scalar_lea.sflag [#allocation6], %s256
        %s258 = sand.u32 %s72, 1
        %s259 = smul.addr %s258, 128
        %s260 = scalar_lea.vmem [#allocation5], %s259
        // Predicated region
        $region41: #{tpu_custom_call.1} parent=35 // pred_check
          %p261 = pneg %p85
        $region42: #{tpu_custom_call.1} parent=35 // pred_check_branch
          %263 = sbr.rel (%p261) target = $region44
        $region43: #{tpu_custom_call.1} parent=35 // pred_region
          %264 = dma.done %s257, 2048
        $region44: #{tpu_custom_call.1} parent=35 // pred_fallthru
          _
        %s265 = sand.u32 %s46, 1
        %s266 = scalar_lea.sflag [#allocation3], %s265
        %s267 = sand.u32 %s46, 1
        %s268 = smul.addr %s267, 8
        %s269 = scalar_lea.vmem [#allocation2], %s268
        %p270 = pneg %p59
        %p271 = pneg %p56
        %s272 = sand.u32 %s72, 1
        %s273 = scalar_lea.sflag [#allocation6], %s272
        %s274 = sand.u32 %s72, 1
        %s275 = smul.addr %s274, 128
        %s276 = scalar_lea.vmem [#allocation5], %s275
        %p277 = pneg %p85
        %p278 = pneg %p82
        %p279 = scmp.lt.s32.totalorder %s28, 0
        %s280 = scalar_select %p279, %s28, 0
        %s281 = smul.addr %s280, 8
        %s282 = scalar_lea.vmem %s2, %s281
        %p283 = pneg %p111
        %p284 = pneg %p108
        %p285 = scmp.lt.s32.totalorder %s28, 0
        %s286 = scalar_select %p285, %s28, 0
        %s287 = smul.addr %s286, 8
        %s288 = scalar_lea.vmem %s3, %s287
        %p289 = pneg %p137
        %p290 = pneg %p134
        %p291 = pneg %p167
        %p292 = pneg %p164
        %s293 = sand.u32 %s154, 1
        %s294 = scalar_lea.sflag [#allocation4], %s293
        %s295 = sand.u32 %s154, 1
        %s296 = scalar_lea.vmem [#allocation7], %s295
        %p297 = scmp.lt.s32.totalorder %s28, 0
        %s298 = scalar_select %p297, %s28, 0
        %s299 = smul.addr %s298, 8
        %s300 = scalar_lea.vmem %s2, %s299
        %p301 = scmp.lt.s32.totalorder %s28, 0
        %s302 = scalar_select %p301, %s28, 0
        %s303 = smul.addr %s302, 8
        %s304 = scalar_lea.vmem %s3, %s303
        %s305 = smul.u32 %s28, 3
        %s306 = sadd.s32 %s305, %s29
        %v307 = vld [vmem:[%s251] sm:$0xff]
        %v308 = vld [vmem:[%s304] sm:$0xff]
        %v309 = vld [vmem:[%s300] sm:$0xff]
        %v310 = vld [vmem:[%s260] sm:$0xff]
        %v311 = vld [vmem:[%s260 + $0x8] sm:$0xff]
        %v312 = vld [vmem:[%s260 + $0x10] sm:$0xff]
        %v313 = vld [vmem:[%s260 + $0x18] sm:$0xff]
        %v314 = vld [vmem:[%s260 + $0x20] sm:$0xff]
        %v315 = vld [vmem:[%s260 + $0x28] sm:$0xff]
        %v316 = vld [vmem:[%s260 + $0x30] sm:$0xff]
        %v317 = vld [vmem:[%s260 + $0x38] sm:$0xff]
        %v318 = vld [vmem:[%s260 + $0x40] sm:$0xff]
        %v319 = vld [vmem:[%s260 + $0x48] sm:$0xff]
        %v320 = vld [vmem:[%s260 + $0x50] sm:$0xff]
        %v321 = vld [vmem:[%s260 + $0x58] sm:$0xff]
        %v322 = vld [vmem:[%s260 + $0x60] sm:$0xff]
        %v323 = vld [vmem:[%s260 + $0x68] sm:$0xff]
        %v324 = vld [vmem:[%s260 + $0x70] sm:$0xff]
        %v325 = vld [vmem:[%s260 + $0x78] sm:$0xff]
        %326 = vmatprep.subr.mxu0 0.0
        %327 = vmatpush1.msra.mxu0 %v325
        %328 = vmatprep.subr.mxu0 0.0
        %329 = vmatpush1.msra.mxu0 %v324
        %330 = vmatprep.subr.mxu0 0.0
        %331 = vmatpush1.msra.mxu0 %v323
        %332 = vmatprep.subr.mxu0 0.0
        %333 = vmatpush1.msra.mxu0 %v322
        %334 = vmatprep.subr.mxu0 0.0
        %335 = vmatpush1.msra.mxu0 %v321
        %336 = vmatprep.subr.mxu0 0.0
        %337 = vmatpush1.msra.mxu0 %v320
        %338 = vmatprep.subr.mxu0 0.0
        %339 = vmatpush1.msra.mxu0 %v319
        %340 = vmatprep.subr.mxu0 0.0
        %341 = vmatpush1.msra.mxu0 %v318
        %342 = vmatprep.subr.mxu0 0.0
        %343 = vmatpush1.msra.mxu0 %v317
        %344 = vmatprep.subr.mxu0 0.0
        %345 = vmatpush1.msra.mxu0 %v316
        %346 = vmatprep.subr.mxu0 0.0
        %347 = vmatpush1.msra.mxu0 %v315
        %348 = vmatprep.subr.mxu0 0.0
        %349 = vmatpush1.msra.mxu0 %v314
        %350 = vmatprep.subr.mxu0 0.0
        %351 = vmatpush1.msra.mxu0 %v313
        %352 = vmatprep.subr.mxu0 0.0
        %353 = vmatpush1.msra.mxu0 %v312
        %354 = vmatprep.subr.mxu0 0.0
        %355 = vmatpush1.msra.mxu0 %v311
        %356 = vmatprep.subr.mxu0 0.0
        %357 = vmatpush1.msra.mxu0 %v310
        %358 = vmatprep.subr.mxu0 0.0
        %359 = vmatpush2.msra.mxu0 0.0
        %360 = vmatprep.subr.mxu0 0.0
        %361 = vmatpush2.msra.mxu0 0.0
        %362 = vmatprep.subr.mxu0 0.0
        %363 = vmatpush2.msra.mxu0 0.0
        %364 = vmatprep.subr.mxu0 0.0
        %365 = vmatpush2.msra.mxu0 0.0
        %366 = vmatprep.subr.mxu0 0.0
        %367 = vmatpush2.msra.mxu0 0.0
        %368 = vmatprep.subr.mxu0 0.0
        %369 = vmatpush2.msra.mxu0 0.0
        %370 = vmatprep.subr.mxu0 0.0
        %371 = vmatpush2.msra.mxu0 0.0
        %372 = vmatprep.subr.mxu0 0.0
        %373 = vmatpush2.msra.mxu0 0.0
        %374 = vmatprep.subr.mxu0 0.0
        %375 = vmatpush2.msra.mxu0 0.0
        %376 = vmatprep.subr.mxu0 0.0
        %377 = vmatpush2.msra.mxu0 0.0
        %378 = vmatprep.subr.mxu0 0.0
        %379 = vmatpush2.msra.mxu0 0.0
        %380 = vmatprep.subr.mxu0 0.0
        %381 = vmatpush2.msra.mxu0 0.0
        %382 = vmatprep.subr.mxu0 0.0
        %383 = vmatpush2.msra.mxu0 0.0
        %384 = vmatprep.subr.mxu0 0.0
        %385 = vmatpush2.msra.mxu0 0.0
        %386 = vmatprep.subr.mxu0 0.0
        %387 = vmatpush2.msra.mxu0 0.0
        %388 = vmatprep.subr.mxu0 0.0
        %389 = vmatpush2.msra.mxu0 0.0
        %390 = vmatprep.mubr.f32.mxu0 0.0
        %391 = vmatmul.mubr.f32.gmra.mxu0 %v309
        %v392 = vpop.f32.mrf.mxu0
        %v393 = vadd.f32 0.0, %v392
        %v394 = vpop.f32.mrf.mxu0
        %395 = vdwg.mxu0
        %397 = vset.pattern.permute.xlu0 0
        %398 = vperm.xlu0 %397, %v308
        %v399 = vpop.permute.xlu0 %398
        %v401 = vmul.f32 %v393, %v399
        %v402 = vmul.f32 %v307, %v401
        %403 = vadd.xlane.f32.xlu0 %v402
        %v404 = vpop.xlane.xlu0 %403
        %v405 = vmul.f32 %v307, %v307
        %406 = vadd.xlane.f32.xlu0 %v405
        %v407 = vpop.xlane.xlu0 %406
        %v408 = vmul.f32 %v401, %v401
        %409 = vadd.xlane.f32.xlu0 %v408
        %v410 = vpop.xlane.xlu0 %409
        %v411 = vmax.f32 %v407, 1e-16
        %v412 = vrsqrt.pop %v411
        %v413 = vmax.f32 %v410, 1e-16
        %v414 = vrsqrt.pop %v413
        %v415 = vmul.f32 %v404, %v412
        %v416 = vmul.f32 %v415, %v414
        %v417 = vrsqrt.pop %v407
        %v418 = vmul.f32 %v407, %v417
        %vm419 = vcmp.eq.f32.partialorder %v407, inf
        %v420 = vsel %vm419, %v407, %v418
        %vm421 = vcmp.eq.f32.partialorder %v407, 0.0
        %v422 = vand.u32 %v407, 2147483648
        %v423 = vsel %vm421, %v422, %v420
        %v424 = vadd.f32 %v407, %v410
        %v425 = vmul.f32 %v404, 2.0
        %v426 = vsub.f32 %v424, %v425
        %v427 = vmax.f32 %v426, 0.0
        %v428 = vrsqrt.pop %v427
        %v429 = vmul.f32 %v427, %v428
        %vm430 = vcmp.eq.f32.partialorder %v427, inf
        %v431 = vsel %vm430, %v427, %v429
        %vm432 = vcmp.eq.f32.partialorder %v427, 0.0
        %v433 = vand.u32 %v427, 2147483648
        %v434 = vsel %vm432, %v433, %v431
        %vm435 = vcmp.gt.f32.partialorder %v308, 0.0
        %v436 = vsel %vm435, 1.0, 0.0
        %v437 = vsub.f32 1.0, %v416
        %v438 = vmul.f32 %v437, %v436
        %vm439 = vcmask 7168
        %v440 = vsel %vm439, %v438, 0.0
        %441 = vadd.xlane.f32.xlu0 %v440
        %v442 = vpop.xlane.xlu0 %441
        %v443 = vrot.slane %v442, 4
        %v444 = vadd.f32 %v442, %v443
        %v445 = vrot.slane %v444, 2
        %v446 = vadd.f32 %v444, %v445
        %v447 = vrot.slane %v446, 1
        %v448 = vadd.f32 %v446, %v447
        %s449 = vtos %v448
        %v450 = vmul.f32 %v434, %v436
        %v451 = vsel %vm439, %v450, 0.0
        %452 = vadd.xlane.f32.xlu0 %v451
        %v453 = vpop.xlane.xlu0 %452
        %v454 = vrot.slane %v453, 4
        %v455 = vadd.f32 %v453, %v454
        %v456 = vrot.slane %v455, 2
        %v457 = vadd.f32 %v455, %v456
        %v458 = vrot.slane %v457, 1
        %v459 = vadd.f32 %v457, %v458
        %s460 = vtos %v459
        %v461 = vsel %vm439, %v423, 0.0
        %462 = vadd.xlane.f32.xlu0 %v461
        %v463 = vpop.xlane.xlu0 %462
        %v464 = vrot.slane %v463, 4
        %v465 = vadd.f32 %v463, %v464
        %v466 = vrot.slane %v465, 2
        %v467 = vadd.f32 %v465, %v466
        %v468 = vrot.slane %v467, 1
        %v469 = vadd.f32 %v467, %v468
        %s470 = vtos %v469
        %v471 = vlaneseq
        %v472 = vand.u32 %v471, 127
        %vm473 = vcmp.eq.s32.totalorder %v472, 0
        %v474 = vstv %s449
        %v475 = vsel %vm473, %v474, 0.0
        %vm476 = vcmp.eq.s32.totalorder %v472, 1
        %v477 = vstv %s460
        %v478 = vsel %vm476, %v477, 0.0
        %v479 = vadd.f32 %v475, %v478
        %vm480 = vcmp.eq.s32.totalorder %v472, 2
        %v481 = vstv %s470
        %v482 = vsel %vm480, %v481, 0.0
        %v483 = vadd.f32 %v479, %v482
        %484 = vst [vmem:[%s296] sm:$0x1] %v483
        %s485 = sand.u32 %s154, 1
        %s486 = scalar_lea.sflag [#allocation4], %s485
        %s487 = sand.u32 %s154, 1
        %s488 = scalar_lea.vmem [#allocation7], %s487
        // Predicated region
        $region45: #{tpu_custom_call.1} parent=35 // pred_check
          %p489 = pneg %p164
        $region46: #{tpu_custom_call.1} parent=35 // pred_check_branch
          %491 = sbr.rel (%p489) target = $region48
        $region47: #{tpu_custom_call.1} parent=35 // pred_region
          %s492 = smul.u32 %s28, 3
          %s493 = sadd.s32 %s492, %s29
          %s495 = ssub.s32 16, 16
          %496 = vsyncadd %s486, %s495
          %s497 = smul.addr %s493, 16
          %s498 = scalar_lea.hbm %s4, %s497
          %s500 = sshll.u32 %s488, 4
          %s501 = int_to_ptr.vmem [resolvable:$true] %s500
          %503 = dma.vmem_to_hbm [thread:$0]  %s501, 16, %s498, %s486
        $region48: #{tpu_custom_call.1} parent=35 // pred_fallthru
          _
      $region36: #{tpu_custom_call.1} parent=5 // pred_fallthru
        _
      %p504 = scmp.le.s32.totalorder 2, %s19
      // Predicated region
      $region49: #{tpu_custom_call.1} parent=5 // pred_check
        %p505 = pneg %p504
      $region50: #{tpu_custom_call.1} parent=5 // pred_check_branch
        %507 = sbr.rel (%p505) target = $region52
      $region51: #{tpu_custom_call.1} parent=5 // pred_region
        %s508 = ssub.s32 %s19, 2
        // Predicated region
        $region53: #{tpu_custom_call.1} parent=51 // pred_check
          %p509 = pneg %p170
        $region54: #{tpu_custom_call.1} parent=51 // pred_check_branch
          %511 = sbr.rel (%p509) target = $region56
        $region55: #{tpu_custom_call.1} parent=51 // pred_region
          %s512 = sand.u32 %s155, 1
          %s513 = scalar_lea.sflag [#allocation4], %s512
          %s514 = sand.u32 %s155, 1
          %s515 = scalar_lea.vmem [#allocation7], %s514
          %516 = dma.done %s513, 16
        $region56: #{tpu_custom_call.1} parent=51 // pred_fallthru
          _
      $region52: #{tpu_custom_call.1} parent=5 // pred_fallthru
        _
    $region6: #{tpu_custom_call.1} parent=1 // loop_footer
      %s23 = sadd.s32 1, %s19
    $region7: #{tpu_custom_call.1} parent=1 // loop_footer_branch
      %18 = sbr.rel target = $region3
    $region8: #{tpu_custom_call.1} parent=1 // loop_exit
      _
    %517 = vsyncpa [#allocation3], 1
    %s518 = scalar_lea.sflag [#allocation3], 1
    %519 = vsyncpa %s518, 1
    %520 = vsyncpa [#allocation6], 1
    %s521 = scalar_lea.sflag [#allocation6], 1
    %522 = vsyncpa %s521, 1
    %523 = vsyncpa [#allocation4], 1
    %s524 = scalar_lea.sflag [#allocation4], 1
    %525 = vsyncpa %s524, 1

</llo_original>
